<compile_context>
chip_gen: v7x
topology: tpu7x:2x2x1
jax: 0.10.0
libtpu: 0.0.40
codegen_flags: <defaults>
</compile_context>

<pallas_src>
import functools

import jax
import jax.numpy as jnp
from jax.experimental import pallas as pl
from jax.experimental.pallas import tpu as pltpu

LANE = 128  # lane-dim width (fixed by hardware vreg layout)

# Ball definitions per mode: (center_x, center_y, center_z, radius^2, (r,g,b)).
# Later entries overwrite earlier ones on overlap (matching torch advanced-
# indexing assignment order in the reference module).
_MODE_BALLS = {
    "balls": (
        (0.4, -0.4, 0.0, 0.1, (1.0, 0.0, 0.0)),
        (-0.5, -0.2, 0.0, 0.8, (0.0, 1.0, 0.0)),
    ),
    "center_balls": (
        (1.0, 1.0, 0.0, 0.1, (1.0, 0.0, 0.0)),
        (-1.0, 1.0, 0.0, 0.1, (0.0, 1.0, 0.0)),
        (1.0, -1.0, 0.0, 0.1, (0.0, 0.0, 1.0)),
        (-1.0, -1.0, 0.0, 0.1, (1.0, 1.0, 1.0)),
    ),
}


def _round_up(v, m):
    return ((v + m - 1) // m) * m


@functools.lru_cache(maxsize=1)
def _tile_params():
    """Returns (target sublane rows per grid step, min grid steps)."""
    try:
        kind = jax.devices()[0].device_kind.lower()
    except Exception:  # pragma: no cover - defensive
        kind = ""
    if "v7" in kind:
        # ~3.2 TB/s per-TC HBM: bigger blocks keep the kernel DMA-dominated
        # (tr=2048 -> ~14 MiB double-buffered, inside the 32 MiB scoped
        # default), and >=2 grid steps so both TensorCores get work.
        return 2048, 2
    # v5e / v6e (and fallback): 1024 rows -> ~7 MiB double-buffered, fits the
    # 16/32 MiB default scoped-VMEM limits and reaches ~85-90% of roofline.
    return 1024, 1


def _debug_nerf_kernel(pos_ref, out_ref, *, balls):
    """Elementwise VPU kernel on full (rows,128) vreg tiles.

    pos_ref: (3, TR, 128)  x/y/z planes for one tile of samples.
    out_ref: (4, TR, 128)  row 0 = density, rows 1..3 = radiance R/G/B.
    All ball parameters are Python scalars baked into the unrolled loop, so
    no array constants are captured by the kernel.
    """
    x = pos_ref[0]  # (TR, 128)
    y = pos_ref[1]
    z = pos_ref[2]

    dens = jnp.zeros(x.shape, dtype=jnp.float32)
    rad_r = jnp.zeros(x.shape, dtype=jnp.float32)
    rad_g = jnp.zeros(x.shape, dtype=jnp.float32)
    rad_b = jnp.zeros(x.shape, dtype=jnp.float32)

    for cx, cy, cz, r2, (cr, cg, cb) in balls:
        dist2 = jnp.square(x - cx) + jnp.square(y - cy) + jnp.square(z - cz)
        inside = dist2 < r2
        # Float density accumulator (no separate bool OR + cast).
        dens = jnp.where(inside, 1.0, dens)
        # Later balls overwrite earlier ones (torch assignment order).
        rad_r = jnp.where(inside, cr, rad_r)
        rad_g = jnp.where(inside, cg, rad_g)
        rad_b = jnp.where(inside, cb, rad_b)

    out_ref[0] = dens
    out_ref[1] = rad_r
    out_ref[2] = rad_g
    out_ref[3] = rad_b


def debug_nerf_forward_planar(pos_planar, mode="balls"):
    """Channel-planar entry point (no layout shuffles around the kernel).

    pos_planar: (3, N) float32.
    Returns (volume_density (N,) float32, radiance_planar (3, N) float32).
    """
    if mode not in _MODE_BALLS:
        return None, None

    n = pos_planar.shape[1]
    target_rows, min_steps = _tile_params()

    # Tile geometry: rows of 128 lanes; rows-per-step is a multiple of 8 so
    # every vector op runs on full (8,128) vregs.
    rows_needed = max(1, pl.cdiv(n, LANE))
    tr = min(target_rows, _round_up(rows_needed, 8))
    if min_steps > 1 and rows_needed > 8 * min_steps:
        # Ensure >=2 grid steps on v7x so both TensorCores get work.
        tr = min(tr, _round_up(pl.cdiv(rows_needed, min_steps), 8))
    rows_pad = pl.cdiv(rows_needed, tr) * tr
    n_pad = rows_pad * LANE

    pos = pos_planar.astype(jnp.float32)
    if n_pad != n:
        pos = jnp.pad(pos, ((0, 0), (0, n_pad - n)))
    pos_planes = pos.reshape(3, rows_pad, LANE)  # layout-preserving reshape

    kernel = functools.partial(_debug_nerf_kernel, balls=_MODE_BALLS[mode])

    out = pl.pallas_call(
        kernel,
        out_shape=jax.ShapeDtypeStruct((4, rows_pad, LANE), jnp.float32),
        grid_spec=pltpu.PrefetchScalarGridSpec(
            num_scalar_prefetch=0,
            grid=(rows_pad // tr,),
            in_specs=[pl.BlockSpec((3, tr, LANE), lambda i: (0, i, 0))],
            out_specs=pl.BlockSpec((4, tr, LANE), lambda i: (0, i, 0)),
        ),
        compiler_params=pltpu.CompilerParams(
            dimension_semantics=("parallel",),
            # Let XLA fuse the transpose/pad producer into the operand instead
            # of materializing an extra HBM pass (row-major wrapper path).
            allow_input_fusion=[True],
        ),
    )(pos_planes)

    out_flat = out.reshape(4, n_pad)  # layout-preserving reshape
    volume_density = out_flat[0, :n]
    radiance_planar = out_flat[1:, :n]
    return volume_density, radiance_planar


@functools.partial(jax.jit, static_argnames=("mode",))
def _forward_rowmajor(position, mode):
    pos_planar = jnp.transpose(position.astype(jnp.float32), (1, 0))
    density, radiance_planar = debug_nerf_forward_planar(pos_planar, mode=mode)
    return density, jnp.transpose(radiance_planar, (1, 0))


def debug_nerf_forward(position, direction, mode="balls"):
    """Pallas implementation of DebugNeRF.forward (PyTorch (N,3) layout).

    position: (N, 3) float32, direction: (N, 3) float32 (unused, as in torch).
    Returns (volume_density (N,) float32, radiance (N, 3) float32).
    """
    del direction  # unused by the reference module as well
    if mode not in _MODE_BALLS:
        return None, None  # matches the torch module's fall-through branch
    return _forward_rowmajor(position, mode)


def _reference_forward(position, mode="balls"):
    """Pure-JAX reference mirroring the torch semantics (for validation)."""
    balls = _MODE_BALLS[mode]
    x, y, z = position[:, 0], position[:, 1], position[:, 2]
    dens = jnp.zeros(position.shape[0], dtype=jnp.float32)
    rad = jnp.zeros((position.shape[0], 3), dtype=jnp.float32)
    for cx, cy, cz, r2, color in balls:
        inside = (jnp.square(x - cx) + jnp.square(y - cy)
                  + jnp.square(z - cz)) < r2
        dens = jnp.where(inside, 1.0, dens)
        rad = jnp.where(inside[:, None], jnp.asarray(color, jnp.float32), rad)
    return dens, rad


if __name__ == "__main__":
    key = jax.random.PRNGKey(0)
    k_pos, k_dir = jax.random.split(key)

    for N in (256, 1000):  # includes a non-multiple-of-128 size (tests padding)
        # positions in roughly [-1.5, 1.5] so points land inside and outside
        position = jax.random.uniform(k_pos, (N, 3), jnp.float32, -1.5, 1.5)
        direction = jax.random.normal(k_dir, (N, 3), jnp.float32)  # unused

        for mode in ("balls", "center_balls"):
            dens, rad = debug_nerf_forward(position, direction, mode=mode)
            dens = jax.block_until_ready(dens)
            rad = jax.block_until_ready(rad)
            dens_ref, rad_ref = _reference_forward(position, mode=mode)
            assert dens.shape == (N,) and rad.shape == (N, 3)
            assert jnp.array_equal(dens, dens_ref), f"density mismatch ({mode}, N={N})"
            assert jnp.array_equal(rad, rad_ref), f"radiance mismatch ({mode}, N={N})"

        # Also exercise the zero-copy channel-planar API.
        dens_p, rad_p = debug_nerf_forward_planar(
            jnp.transpose(position, (1, 0)), mode="balls")
        dens_p = jax.block_until_ready(dens_p)
        rad_p = jax.block_until_ready(rad_p)
        dens_ref, rad_ref = _reference_forward(position, mode="balls")
        assert jnp.array_equal(dens_p, dens_ref)
        assert jnp.array_equal(jnp.transpose(rad_p, (1, 0)), rad_ref)

    print("KERNEL_OK")
</pallas_src>

<mosaic_0001>
module attributes {stable_mosaic.version = 11 : i64} {
  func.func @_debug_nerf_kernel(%arg0: i32, %arg1: memref<3x8x128xf32, #tpu.memory_space<vmem>>, %arg2: memref<4x8x128xf32, #tpu.memory_space<vmem>>) attributes {dimension_semantics = [#tpu.dimension_semantics<parallel>], iteration_bounds = array<i64: 1>, scalar_prefetch = 0 : i64, scratch_operands = 0 : i64, tpu.core_type = #tpu.core_type<tc>, window_params = [{transform_indices = @transform_0, window_bounds = array<i64: 3, 8, 128>}, {transform_indices = @transform_1, window_bounds = array<i64: 4, 8, 128>}]} {
    %c0 = arith.constant 0 : index
    %c0_0 = arith.constant 0 : index
    %c0_1 = arith.constant 0 : index
    %0 = vector.load %arg1[%c0, %c0_0, %c0_1] : memref<3x8x128xf32, #tpu.memory_space<vmem>>, vector<1x8x128xf32>
    %1 = vector.shape_cast %0 : vector<1x8x128xf32> to vector<8x128xf32>
    %c1 = arith.constant 1 : index
    %c0_2 = arith.constant 0 : index
    %c0_3 = arith.constant 0 : index
    %2 = vector.load %arg1[%c1, %c0_2, %c0_3] : memref<3x8x128xf32, #tpu.memory_space<vmem>>, vector<1x8x128xf32>
    %3 = vector.shape_cast %2 : vector<1x8x128xf32> to vector<8x128xf32>
    %c2 = arith.constant 2 : index
    %c0_4 = arith.constant 0 : index
    %c0_5 = arith.constant 0 : index
    %4 = vector.load %arg1[%c2, %c0_4, %c0_5] : memref<3x8x128xf32, #tpu.memory_space<vmem>>, vector<1x8x128xf32>
    %5 = vector.shape_cast %4 : vector<1x8x128xf32> to vector<8x128xf32>
    %cst = arith.constant 0.000000e+00 : f32
    %6 = vector.broadcast %cst : f32 to vector<8x128xf32>
    %cst_6 = arith.constant 0.000000e+00 : f32
    %7 = vector.broadcast %cst_6 : f32 to vector<8x128xf32>
    %cst_7 = arith.constant 0.000000e+00 : f32
    %8 = vector.broadcast %cst_7 : f32 to vector<8x128xf32>
    %cst_8 = arith.constant 0.000000e+00 : f32
    %9 = vector.broadcast %cst_8 : f32 to vector<8x128xf32>
    %cst_9 = arith.constant 4.000000e-01 : f32
    %10 = vector.broadcast %cst_9 : f32 to vector<8x128xf32>
    %11 = arith.subf %1, %10 : vector<8x128xf32>
    %12 = arith.mulf %11, %11 : vector<8x128xf32>
    %cst_10 = arith.constant -4.000000e-01 : f32
    %13 = vector.broadcast %cst_10 : f32 to vector<8x128xf32>
    %14 = arith.subf %3, %13 : vector<8x128xf32>
    %15 = arith.mulf %14, %14 : vector<8x128xf32>
    %16 = arith.addf %12, %15 : vector<8x128xf32>
    %cst_11 = arith.constant 0.000000e+00 : f32
    %17 = vector.broadcast %cst_11 : f32 to vector<8x128xf32>
    %18 = arith.subf %5, %17 : vector<8x128xf32>
    %19 = arith.mulf %18, %18 : vector<8x128xf32>
    %20 = arith.addf %16, %19 : vector<8x128xf32>
    %cst_12 = arith.constant 1.000000e-01 : f32
    %21 = vector.broadcast %cst_12 : f32 to vector<8x128xf32>
    %22 = arith.cmpf olt, %20, %21 : vector<8x128xf32>
    %cst_13 = arith.constant 1.000000e+00 : f32
    %23 = vector.broadcast %cst_13 : f32 to vector<8x128xf32>
    %24 = arith.select %22, %23, %6 : vector<8x128xi1>, vector<8x128xf32>
    %cst_14 = arith.constant 1.000000e+00 : f32
    %25 = vector.broadcast %cst_14 : f32 to vector<8x128xf32>
    %26 = arith.select %22, %25, %7 : vector<8x128xi1>, vector<8x128xf32>
    %cst_15 = arith.constant 0.000000e+00 : f32
    %27 = vector.broadcast %cst_15 : f32 to vector<8x128xf32>
    %28 = arith.select %22, %27, %8 : vector<8x128xi1>, vector<8x128xf32>
    %cst_16 = arith.constant 0.000000e+00 : f32
    %29 = vector.broadcast %cst_16 : f32 to vector<8x128xf32>
    %30 = arith.select %22, %29, %9 : vector<8x128xi1>, vector<8x128xf32>
    %cst_17 = arith.constant -5.000000e-01 : f32
    %31 = vector.broadcast %cst_17 : f32 to vector<8x128xf32>
    %32 = arith.subf %1, %31 : vector<8x128xf32>
    %33 = arith.mulf %32, %32 : vector<8x128xf32>
    %cst_18 = arith.constant -2.000000e-01 : f32
    %34 = vector.broadcast %cst_18 : f32 to vector<8x128xf32>
    %35 = arith.subf %3, %34 : vector<8x128xf32>
    %36 = arith.mulf %35, %35 : vector<8x128xf32>
    %37 = arith.addf %33, %36 : vector<8x128xf32>
    %cst_19 = arith.constant 0.000000e+00 : f32
    %38 = vector.broadcast %cst_19 : f32 to vector<8x128xf32>
    %39 = arith.subf %5, %38 : vector<8x128xf32>
    %40 = arith.mulf %39, %39 : vector<8x128xf32>
    %41 = arith.addf %37, %40 : vector<8x128xf32>
    %cst_20 = arith.constant 8.000000e-01 : f32
    %42 = vector.broadcast %cst_20 : f32 to vector<8x128xf32>
    %43 = arith.cmpf olt, %41, %42 : vector<8x128xf32>
    %cst_21 = arith.constant 1.000000e+00 : f32
    %44 = vector.broadcast %cst_21 : f32 to vector<8x128xf32>
    %45 = arith.select %43, %44, %24 : vector<8x128xi1>, vector<8x128xf32>
    %cst_22 = arith.constant 0.000000e+00 : f32
    %46 = vector.broadcast %cst_22 : f32 to vector<8x128xf32>
    %47 = arith.select %43, %46, %26 : vector<8x128xi1>, vector<8x128xf32>
    %cst_23 = arith.constant 1.000000e+00 : f32
    %48 = vector.broadcast %cst_23 : f32 to vector<8x128xf32>
    %49 = arith.select %43, %48, %28 : vector<8x128xi1>, vector<8x128xf32>
    %cst_24 = arith.constant 0.000000e+00 : f32
    %50 = vector.broadcast %cst_24 : f32 to vector<8x128xf32>
    %51 = arith.select %43, %50, %30 : vector<8x128xi1>, vector<8x128xf32>
    %c0_25 = arith.constant 0 : index
    %c0_26 = arith.constant 0 : index
    %c0_27 = arith.constant 0 : index
    %52 = vector.load %arg2[%c0_25, %c0_26, %c0_27] : memref<4x8x128xf32, #tpu.memory_space<vmem>>, vector<1x8x128xf32>
    %53 = vector.shape_cast %52 : vector<1x8x128xf32> to vector<8x128xf32>
    %54 = vector.shape_cast %45 : vector<8x128xf32> to vector<1x8x128xf32>
    tpu.vector_store %arg2[%c0_25, %c0_26, %c0_27], %54 {strides = array<i32>} : memref<4x8x128xf32, #tpu.memory_space<vmem>>, vector<1x8x128xf32>,
    %c1_28 = arith.constant 1 : index
    %c0_29 = arith.constant 0 : index
    %c0_30 = arith.constant 0 : index
    %55 = vector.load %arg2[%c1_28, %c0_29, %c0_30] : memref<4x8x128xf32, #tpu.memory_space<vmem>>, vector<1x8x128xf32>
    %56 = vector.shape_cast %55 : vector<1x8x128xf32> to vector<8x128xf32>
    %57 = vector.shape_cast %47 : vector<8x128xf32> to vector<1x8x128xf32>
    tpu.vector_store %arg2[%c1_28, %c0_29, %c0_30], %57 {strides = array<i32>} : memref<4x8x128xf32, #tpu.memory_space<vmem>>, vector<1x8x128xf32>,
    %c2_31 = arith.constant 2 : index
    %c0_32 = arith.constant 0 : index
    %c0_33 = arith.constant 0 : index
    %58 = vector.load %arg2[%c2_31, %c0_32, %c0_33] : memref<4x8x128xf32, #tpu.memory_space<vmem>>, vector<1x8x128xf32>
    %59 = vector.shape_cast %58 : vector<1x8x128xf32> to vector<8x128xf32>
    %60 = vector.shape_cast %49 : vector<8x128xf32> to vector<1x8x128xf32>
    tpu.vector_store %arg2[%c2_31, %c0_32, %c0_33], %60 {strides = array<i32>} : memref<4x8x128xf32, #tpu.memory_space<vmem>>, vector<1x8x128xf32>,
    %c3 = arith.constant 3 : index
    %c0_34 = arith.constant 0 : index
    %c0_35 = arith.constant 0 : index
    %61 = vector.load %arg2[%c3, %c0_34, %c0_35] : memref<4x8x128xf32, #tpu.memory_space<vmem>>, vector<1x8x128xf32>
    %62 = vector.shape_cast %61 : vector<1x8x128xf32> to vector<8x128xf32>
    %63 = vector.shape_cast %51 : vector<8x128xf32> to vector<1x8x128xf32>
    tpu.vector_store %arg2[%c3, %c0_34, %c0_35], %63 {strides = array<i32>} : memref<4x8x128xf32, #tpu.memory_space<vmem>>, vector<1x8x128xf32>,
    return
  }
  func.func @transform_0(%arg0: i32) -> (i32, i32, i32) {
    %c0_i32 = arith.constant 0 : i32
    %c0_i32_0 = arith.constant 0 : i32
    %c0_i32_1 = arith.constant 0 : i32
    return %c0_i32, %arg0, %c0_i32_0 : i32, i32, i32
  }
  func.func @transform_1(%arg0: i32) -> (i32, i32, i32) {
    %c0_i32 = arith.constant 0 : i32
    %c0_i32_0 = arith.constant 0 : i32
    %c0_i32_1 = arith.constant 0 : i32
    return %c0_i32, %arg0, %c0_i32_0 : i32, i32, i32
  }
}

</mosaic_0001>

<llo_original>
// kernel: _forward_rowmajor.2
$region0: #{_forward_rowmajor.2}
  #allocation0 [shape = 'u32[]', space=smem, size = 0x4, offset = 0x4, fixed_abs, tag = 'smem constant byte address 0x4 - core index']
  #allocation1 [shape = 'u32[144,128]{1,0:T(1,128)}', space=vmem, size = 0x12000, scoped, tag = 'internal scratch']
  %s0 = inlined_call_operand.vmem [shape: f32[1,3,8,128], index: 0, kind: input, shape index: {}]
  %s1 = inlined_call_operand.vmem [shape: f32[4,8,128], index: 1, kind: output, shape index: {}]
  %s2 = sld [smem:[#allocation0]]
  $region14: #{_forward_rowmajor.2} parent=0
    _
  %s4 = ssub.s32 1, %s2
  %s5 = scalar_select 0, %s4, %s2
  $region1: #{_forward_rowmajor.2} parent=0
    #allocation2 [shape = 'u8[12288]{0}', space=vmem, size = 0x3000, dematerialized = true, scoped, tag = 'FusionAdapter Buffer %fusion.1 = f32[3,8,128]{2,1,0:T(8,128)} fusion(%param_0.5), kind=kLoop, calls=%fused_computation.3.clone, metadata={op_name="jit(_forward_rowmajor)/reshape" stack_frame_id=12}']
    // Predicated region
    $region2: #{_forward_rowmajor.2} parent=1 // pred_check
      _
    $region3: #{_forward_rowmajor.2} parent=1 // pred_check_branch
      %7 = sbr.rel (0) target = $region5
    $region4: #{_forward_rowmajor.2} parent=1 // pred_region
      _
    $region5: #{_forward_rowmajor.2} parent=1 // pred_fallthru
      _
    %v8 = vld [vmem:[%s0] sm:$0xff]
    %10 = vst [vmem:[#allocation2] sm:$0xff] %v8
    %s11 = scalar_lea.vmem %s0, 8
    %v12 = vld [vmem:[%s11] sm:$0xff]
    %s13 = scalar_lea.vmem [#allocation2], 8
    %15 = vst [vmem:[%s13] sm:$0xff] %v12
    %s16 = scalar_lea.vmem %s0, 16
    %v17 = vld [vmem:[%s16] sm:$0xff]
    %s18 = scalar_lea.vmem [#allocation2], 16
    %20 = vst [vmem:[%s18] sm:$0xff] %v17
    %v21 = vld [vmem:[#allocation2] sm:$0xff]
    %s22 = scalar_lea.vmem [#allocation2], 8
    %v23 = vld [vmem:[%s22] sm:$0xff]
    %s24 = scalar_lea.vmem [#allocation2], 16
    %v25 = vld [vmem:[%s24] sm:$0xff]
    %v26 = vsub.f32 %v21, 0.4
    %v27 = vmul.f32 %v26, %v26
    %v28 = vsub.f32 %v23, -0.4
    %v29 = vmul.f32 %v28, %v28
    %v30 = vadd.f32 %v27, %v29
    %v31 = vmul.f32 %v25, %v25
    %v32 = vadd.f32 %v30, %v31
    %vm33 = vcmp.lt.f32.partialorder %v32, 0.1
    %v34 = vsel %vm33, 1.0, 0.0
    %v35 = vsub.f32 %v21, -0.5
    %v36 = vmul.f32 %v35, %v35
    %v37 = vsub.f32 %v23, -0.2
    %v38 = vmul.f32 %v37, %v37
    %v39 = vadd.f32 %v36, %v38
    %v40 = vadd.f32 %v39, %v31
    %vm41 = vcmp.lt.f32.partialorder %v40, 0.8
    %v42 = vsel %vm41, 1.0, %v34
    %v43 = vsel %vm41, 0.0, %v34
    %v44 = vsel %vm41, 1.0, 0.0
    %45 = vst [vmem:[%s1] sm:$0xff] %v42
    %s46 = scalar_lea.vmem %s1, 8
    %47 = vst [vmem:[%s46] sm:$0xff] %v43
    %s48 = scalar_lea.vmem %s1, 16
    %49 = vst [vmem:[%s48] sm:$0xff] %v44
    %s50 = scalar_lea.vmem %s1, 24
    %51 = vst [vmem:[%s50] sm:$0xff] 0.0
    // Predicated region
    $region6: #{_forward_rowmajor.2} parent=1 // pred_check
      _
    $region7: #{_forward_rowmajor.2} parent=1 // pred_check_branch
      %53 = sbr.rel (0) target = $region9
    $region8: #{_forward_rowmajor.2} parent=1 // pred_region
      _
    $region9: #{_forward_rowmajor.2} parent=1 // pred_fallthru
      _
    // Predicated region
    $region10: #{_forward_rowmajor.2} parent=1 // pred_check
      _
    $region11: #{_forward_rowmajor.2} parent=1 // pred_check_branch
      %55 = sbr.rel (0) target = $region13
    $region12: #{_forward_rowmajor.2} parent=1 // pred_region
      _
    $region13: #{_forward_rowmajor.2} parent=1 // pred_fallthru
      _

</llo_original>
